<compile_context>
chip_gen: v7x
topology: tpu7x:2x2x1
jax: 0.10.0
libtpu: 0.0.40
codegen_flags: <defaults>
</compile_context>

<pallas_src>
import functools
import math

import jax
import jax.numpy as jnp
from jax import lax
from jax.experimental import pallas as pl
from jax.experimental.pallas import tpu as pltpu


def _attention_head_kernel(xq_ref, xkv_ref, wq_ref, bq_ref, wk_ref, bk_ref,
                           wv_ref, bv_ref, out_ref, probs_ref, *, scale):
    """One (batch, q-tile) grid step.

    Refs (VMEM tiles, leading batch dim squeezed away by the BlockSpecs):
      xq_ref    : (TQ, H)  query rows for this step
      xkv_ref   : (S,  H)  full sequence for this batch (resident across q tiles)
      w*_ref    : (H,  D)  projection weights (pre-transposed, x @ W + b)
      b*_ref    : (1,  D)
      out_ref   : (TQ, D)
      probs_ref : (TQ, S)
    """
    xkv = xkv_ref[...]

    # Projections: native-dtype inputs straight into the MXU, f32 accumulation.
    k = jnp.dot(xkv, wk_ref[...], preferred_element_type=jnp.float32) + bk_ref[...]
    v = jnp.dot(xkv, wv_ref[...], preferred_element_type=jnp.float32) + bv_ref[...]
    q = jnp.dot(xq_ref[...], wq_ref[...],
                preferred_element_type=jnp.float32) + bq_ref[...]

    # Fold 1/sqrt(D) into q (TQ*D mults instead of TQ*S on the scores).
    q = q * scale

    # scores = q @ k^T without materializing a transpose (contract dim 1 vs 1).
    scores = lax.dot_general(
        q, k,
        dimension_numbers=(((1,), (1,)), ((), ())),
        preferred_element_type=jnp.float32,
    )  # (TQ, S)

    # Numerically-stable softmax; exact divide because probs is returned.
    m = jnp.max(scores, axis=-1, keepdims=True)
    e = jnp.exp(scores - m)
    denom = jnp.sum(e, axis=-1, keepdims=True)
    probs = e / denom  # (TQ, S) f32, rows sum to 1

    # probs @ v in the activation dtype (bf16 MXU path when x is bf16),
    # f32 accumulation.  Eval-mode dropout == identity.
    act_dtype = xq_ref.dtype
    out = jnp.dot(probs.astype(act_dtype), v.astype(act_dtype),
                  preferred_element_type=jnp.float32)  # (TQ, D)

    probs_ref[...] = probs.astype(probs_ref.dtype)
    out_ref[...] = out.astype(out_ref.dtype)


def attention_head(x, wq, bq, wk, bk, wv, bv, *, tq=None):
    """x: (B, S, H). Weights: (H, D) (so y = x @ W + b). Biases: (1, D).

    Returns (attention_output (B, S, D), attention_probs (B, S, S)).
    """
    B, S, H = x.shape
    D = wq.shape[1]
    if tq is None:
        tq = S  # toy sizes: whole sequence per step
    assert S % tq == 0, "tq must divide S"
    scale = 1.0 / math.sqrt(float(D))

    out_shapes = (
        jax.ShapeDtypeStruct((B, S, D), x.dtype),
        jax.ShapeDtypeStruct((B, S, S), x.dtype),
    )

    kernel = functools.partial(_attention_head_kernel, scale=scale)

    return pl.pallas_call(
        kernel,
        out_shape=out_shapes,
        grid_spec=pltpu.PrefetchScalarGridSpec(
            num_scalar_prefetch=0,
            grid=(B, S // tq),
            in_specs=[
                # Query rows for this step (advance with q-tile axis).
                pl.BlockSpec((None, tq, H), lambda b, qi: (b, qi, 0)),
                # Full-sequence slab for K/V; constant over q axis -> resident.
                pl.BlockSpec((None, S, H), lambda b, qi: (b, 0, 0)),
                pl.BlockSpec((H, D), lambda b, qi: (0, 0)),   # Wq
                pl.BlockSpec((1, D), lambda b, qi: (0, 0)),   # bq
                pl.BlockSpec((H, D), lambda b, qi: (0, 0)),   # Wk
                pl.BlockSpec((1, D), lambda b, qi: (0, 0)),   # bk
                pl.BlockSpec((H, D), lambda b, qi: (0, 0)),   # Wv
                pl.BlockSpec((1, D), lambda b, qi: (0, 0)),   # bv
            ],
            out_specs=(
                pl.BlockSpec((None, tq, D), lambda b, qi: (b, qi, 0)),  # output
                pl.BlockSpec((None, tq, S), lambda b, qi: (b, qi, 0)),  # probs
            ),
        ),
        compiler_params=pltpu.CompilerParams(
            # Both axes write independent tiles -> parallel (2 TCs on v7x).
            dimension_semantics=("parallel", "parallel"),
        ),
    )(x, x, wq, bq, wk, bk, wv, bv)


def reference_attention_head(x, wq, bq, wk, bk, wv, bv):
    """Pure-JAX reference matching the PyTorch forward (eval mode)."""
    q = jnp.einsum("bsh,hd->bsd", x, wq) + bq[0]
    k = jnp.einsum("bsh,hd->bsd", x, wk) + bk[0]
    v = jnp.einsum("bsh,hd->bsd", x, wv) + bv[0]
    scores = jnp.einsum("bqd,bkd->bqk", q, k) / math.sqrt(q.shape[-1])
    probs = jax.nn.softmax(scores, axis=-1)
    out = jnp.einsum("bqk,bkd->bqd", probs, v)
    return out, probs


if __name__ == "__main__":
    # Small shapes consistent with the module: hidden_size=32, head_size=16.
    B, S, H, D = 2, 8, 32, 16

    key = jax.random.PRNGKey(0)
    kx, kwq, kbq, kwk, kbk, kwv, kbv = jax.random.split(key, 7)

    x = jax.random.normal(kx, (B, S, H), dtype=jnp.float32)

    # Deterministic synthetic parameters (shapes implied by nn.Linear(H, D)).
    scale = 1.0 / math.sqrt(H)
    wq = jax.random.uniform(kwq, (H, D), jnp.float32, -scale, scale)
    bq = jax.random.uniform(kbq, (1, D), jnp.float32, -scale, scale)
    wk = jax.random.uniform(kwk, (H, D), jnp.float32, -scale, scale)
    bk = jax.random.uniform(kbk, (1, D), jnp.float32, -scale, scale)
    wv = jax.random.uniform(kwv, (H, D), jnp.float32, -scale, scale)
    bv = jax.random.uniform(kbv, (1, D), jnp.float32, -scale, scale)

    out, probs = attention_head(x, wq, bq, wk, bk, wv, bv)
    out = jax.block_until_ready(out)
    probs = jax.block_until_ready(probs)

    ref_out, ref_probs = reference_attention_head(x, wq, bq, wk, bk, wv, bv)

    assert out.shape == (B, S, D)
    assert probs.shape == (B, S, S)
    assert jnp.allclose(out, ref_out, atol=2e-3, rtol=2e-3)
    assert jnp.allclose(probs, ref_probs, atol=2e-3, rtol=2e-3)
    # Softmax rows should sum to ~1 (exact divide, no approx reciprocal).
    assert jnp.allclose(jnp.sum(probs, axis=-1), 1.0, atol=1e-5)

    print("KERNEL_OK")
</pallas_src>

<mosaic_0001>
module attributes {stable_mosaic.version = 11 : i64} {
  func.func @_attention_head_kernel(%arg0: i32, %arg1: i32, %arg2: memref<1x8x32xf32, #tpu.memory_space<vmem>>, %arg3: memref<1x8x32xf32, #tpu.memory_space<vmem>>, %arg4: memref<32x16xf32, #tpu.memory_space<vmem>>, %arg5: memref<1x16xf32, #tpu.memory_space<vmem>>, %arg6: memref<32x16xf32, #tpu.memory_space<vmem>>, %arg7: memref<1x16xf32, #tpu.memory_space<vmem>>, %arg8: memref<32x16xf32, #tpu.memory_space<vmem>>, %arg9: memref<1x16xf32, #tpu.memory_space<vmem>>, %arg10: memref<1x8x16xf32, #tpu.memory_space<vmem>>, %arg11: memref<1x8x8xf32, #tpu.memory_space<vmem>>) attributes {dimension_semantics = [#tpu.dimension_semantics<parallel>, #tpu.dimension_semantics<parallel>], iteration_bounds = array<i64: 2, 1>, scalar_prefetch = 0 : i64, scratch_operands = 0 : i64, tpu.core_type = #tpu.core_type<tc>, window_params = [{transform_indices = @transform_0, window_bounds = array<i64: 1, 8, 32>}, {transform_indices = @transform_1, window_bounds = array<i64: 1, 8, 32>}, {pipeline_mode = #tpu.pipeline_mode<synchronous>, transform_indices = @transform_2, window_bounds = array<i64: 32, 16>}, {pipeline_mode = #tpu.pipeline_mode<synchronous>, transform_indices = @transform_3, window_bounds = array<i64: 1, 16>}, {pipeline_mode = #tpu.pipeline_mode<synchronous>, transform_indices = @transform_4, window_bounds = array<i64: 32, 16>}, {pipeline_mode = #tpu.pipeline_mode<synchronous>, transform_indices = @transform_5, window_bounds = array<i64: 1, 16>}, {pipeline_mode = #tpu.pipeline_mode<synchronous>, transform_indices = @transform_6, window_bounds = array<i64: 32, 16>}, {pipeline_mode = #tpu.pipeline_mode<synchronous>, transform_indices = @transform_7, window_bounds = array<i64: 1, 16>}, {transform_indices = @transform_8, window_bounds = array<i64: 1, 8, 16>}, {transform_indices = @transform_9, window_bounds = array<i64: 1, 8, 8>}]} {
    %c0 = arith.constant 0 : index
    %c0_0 = arith.constant 0 : index
    %c0_1 = arith.constant 0 : index
    %0 = vector.load %arg3[%c0, %c0_0, %c0_1] : memref<1x8x32xf32, #tpu.memory_space<vmem>>, vector<1x8x32xf32>
    %1 = vector.shape_cast %0 : vector<1x8x32xf32> to vector<8x32xf32>
    %c0_2 = arith.constant 0 : index
    %c0_3 = arith.constant 0 : index
    %2 = vector.load %arg6[%c0_2, %c0_3] : memref<32x16xf32, #tpu.memory_space<vmem>>, vector<32x16xf32>
    %cst = arith.constant dense<0.000000e+00> : vector<8x16xf32>
    %3 = tpu.matmul %1, %2, %cst {dimension_numbers = #tpu.dot_dimension_numbers<[1], [0], [0], [1], [0, 0, 1, 1], [], []>} : vector<8x32xf32>, vector<32x16xf32>, vector<8x16xf32> -> vector<8x16xf32>
    %c0_4 = arith.constant 0 : index
    %c0_5 = arith.constant 0 : index
    %4 = vector.load %arg7[%c0_4, %c0_5] : memref<1x16xf32, #tpu.memory_space<vmem>>, vector<1x16xf32>
    %5 = vector.broadcast %4 : vector<1x16xf32> to vector<8x16xf32>
    %6 = arith.addf %3, %5 : vector<8x16xf32>
    %c0_6 = arith.constant 0 : index
    %c0_7 = arith.constant 0 : index
    %7 = vector.load %arg8[%c0_6, %c0_7] : memref<32x16xf32, #tpu.memory_space<vmem>>, vector<32x16xf32>
    %cst_8 = arith.constant dense<0.000000e+00> : vector<8x16xf32>
    %8 = tpu.matmul %1, %7, %cst_8 {dimension_numbers = #tpu.dot_dimension_numbers<[1], [0], [0], [1], [0, 0, 1, 1], [], []>} : vector<8x32xf32>, vector<32x16xf32>, vector<8x16xf32> -> vector<8x16xf32>
    %c0_9 = arith.constant 0 : index
    %c0_10 = arith.constant 0 : index
    %9 = vector.load %arg9[%c0_9, %c0_10] : memref<1x16xf32, #tpu.memory_space<vmem>>, vector<1x16xf32>
    %10 = vector.broadcast %9 : vector<1x16xf32> to vector<8x16xf32>
    %11 = arith.addf %8, %10 : vector<8x16xf32>
    %c0_11 = arith.constant 0 : index
    %c0_12 = arith.constant 0 : index
    %c0_13 = arith.constant 0 : index
    %12 = vector.load %arg2[%c0_11, %c0_12, %c0_13] : memref<1x8x32xf32, #tpu.memory_space<vmem>>, vector<1x8x32xf32>
    %13 = vector.shape_cast %12 : vector<1x8x32xf32> to vector<8x32xf32>
    %c0_14 = arith.constant 0 : index
    %c0_15 = arith.constant 0 : index
    %14 = vector.load %arg4[%c0_14, %c0_15] : memref<32x16xf32, #tpu.memory_space<vmem>>, vector<32x16xf32>
    %cst_16 = arith.constant dense<0.000000e+00> : vector<8x16xf32>
    %15 = tpu.matmul %13, %14, %cst_16 {dimension_numbers = #tpu.dot_dimension_numbers<[1], [0], [0], [1], [0, 0, 1, 1], [], []>} : vector<8x32xf32>, vector<32x16xf32>, vector<8x16xf32> -> vector<8x16xf32>
    %c0_17 = arith.constant 0 : index
    %c0_18 = arith.constant 0 : index
    %16 = vector.load %arg5[%c0_17, %c0_18] : memref<1x16xf32, #tpu.memory_space<vmem>>, vector<1x16xf32>
    %17 = vector.broadcast %16 : vector<1x16xf32> to vector<8x16xf32>
    %18 = arith.addf %15, %17 : vector<8x16xf32>
    %cst_19 = arith.constant 2.500000e-01 : f32
    %19 = vector.broadcast %cst_19 : f32 to vector<8x16xf32>
    %20 = arith.mulf %18, %19 : vector<8x16xf32>
    %cst_20 = arith.constant dense<0.000000e+00> : vector<8x8xf32>
    %21 = tpu.matmul %20, %6, %cst_20 {dimension_numbers = #tpu.dot_dimension_numbers<[1], [1], [0], [0], [0, 0, 1, 0], [], []>} : vector<8x16xf32>, vector<8x16xf32>, vector<8x8xf32> -> vector<8x8xf32>
    %cst_21 = arith.constant dense<0xFF800000> : vector<8xf32>
    %22 = vector.multi_reduction <maximumf>, %21, %cst_21 [1] : vector<8x8xf32> to vector<8xf32>
    %23 = vector.shape_cast %22 : vector<8xf32> to vector<8x1xf32>
    %24 = vector.broadcast %23 : vector<8x1xf32> to vector<8x8xf32>
    %25 = arith.subf %21, %24 : vector<8x8xf32>
    %26 = math.exp %25 : vector<8x8xf32>
    %cst_22 = arith.constant dense<0.000000e+00> : vector<8xf32>
    %27 = vector.multi_reduction <add>, %26, %cst_22 [1] : vector<8x8xf32> to vector<8xf32>
    %28 = vector.shape_cast %27 : vector<8xf32> to vector<8x1xf32>
    %29 = vector.broadcast %28 : vector<8x1xf32> to vector<8x8xf32>
    %30 = arith.divf %26, %29 : vector<8x8xf32>
    %cst_23 = arith.constant dense<0.000000e+00> : vector<8x16xf32>
    %31 = tpu.matmul %30, %11, %cst_23 {dimension_numbers = #tpu.dot_dimension_numbers<[1], [0], [0], [1], [0, 0, 1, 1], [], []>} : vector<8x8xf32>, vector<8x16xf32>, vector<8x16xf32> -> vector<8x16xf32>
    %c0_24 = arith.constant 0 : index
    %c0_25 = arith.constant 0 : index
    %c0_26 = arith.constant 0 : index
    %32 = vector.load %arg11[%c0_24, %c0_25, %c0_26] : memref<1x8x8xf32, #tpu.memory_space<vmem>>, vector<1x8x8xf32>
    %33 = vector.shape_cast %32 : vector<1x8x8xf32> to vector<8x8xf32>
    %34 = vector.shape_cast %30 : vector<8x8xf32> to vector<1x8x8xf32>
    tpu.vector_store %arg11[%c0_24, %c0_25, %c0_26], %34 {strides = array<i32>} : memref<1x8x8xf32, #tpu.memory_space<vmem>>, vector<1x8x8xf32>,
    %c0_27 = arith.constant 0 : index
    %c0_28 = arith.constant 0 : index
    %c0_29 = arith.constant 0 : index
    %35 = vector.load %arg10[%c0_27, %c0_28, %c0_29] : memref<1x8x16xf32, #tpu.memory_space<vmem>>, vector<1x8x16xf32>
    %36 = vector.shape_cast %35 : vector<1x8x16xf32> to vector<8x16xf32>
    %37 = vector.shape_cast %31 : vector<8x16xf32> to vector<1x8x16xf32>
    tpu.vector_store %arg10[%c0_27, %c0_28, %c0_29], %37 {strides = array<i32>} : memref<1x8x16xf32, #tpu.memory_space<vmem>>, vector<1x8x16xf32>,
    return
  }
  func.func @transform_0(%arg0: i32, %arg1: i32) -> (i32, i32, i32) {
    %c0_i32 = arith.constant 0 : i32
    %c0_i32_0 = arith.constant 0 : i32
    return %arg0, %arg1, %c0_i32 : i32, i32, i32
  }
  func.func @transform_1(%arg0: i32, %arg1: i32) -> (i32, i32, i32) {
    %c0_i32 = arith.constant 0 : i32
    %c0_i32_0 = arith.constant 0 : i32
    %c0_i32_1 = arith.constant 0 : i32
    return %arg0, %c0_i32, %c0_i32_0 : i32, i32, i32
  }
  func.func @transform_2(%arg0: i32, %arg1: i32) -> (i32, i32) {
    %c0_i32 = arith.constant 0 : i32
    %c0_i32_0 = arith.constant 0 : i32
    %c0_i32_1 = arith.constant 0 : i32
    return %c0_i32, %c0_i32_0 : i32, i32
  }
  func.func @transform_3(%arg0: i32, %arg1: i32) -> (i32, i32) {
    %c0_i32 = arith.constant 0 : i32
    %c0_i32_0 = arith.constant 0 : i32
    %c0_i32_1 = arith.constant 0 : i32
    return %c0_i32, %c0_i32_0 : i32, i32
  }
  func.func @transform_4(%arg0: i32, %arg1: i32) -> (i32, i32) {
    %c0_i32 = arith.constant 0 : i32
    %c0_i32_0 = arith.constant 0 : i32
    %c0_i32_1 = arith.constant 0 : i32
    return %c0_i32, %c0_i32_0 : i32, i32
  }
  func.func @transform_5(%arg0: i32, %arg1: i32) -> (i32, i32) {
    %c0_i32 = arith.constant 0 : i32
    %c0_i32_0 = arith.constant 0 : i32
    %c0_i32_1 = arith.constant 0 : i32
    return %c0_i32, %c0_i32_0 : i32, i32
  }
  func.func @transform_6(%arg0: i32, %arg1: i32) -> (i32, i32) {
    %c0_i32 = arith.constant 0 : i32
    %c0_i32_0 = arith.constant 0 : i32
    %c0_i32_1 = arith.constant 0 : i32
    return %c0_i32, %c0_i32_0 : i32, i32
  }
  func.func @transform_7(%arg0: i32, %arg1: i32) -> (i32, i32) {
    %c0_i32 = arith.constant 0 : i32
    %c0_i32_0 = arith.constant 0 : i32
    %c0_i32_1 = arith.constant 0 : i32
    return %c0_i32, %c0_i32_0 : i32, i32
  }
  func.func @transform_8(%arg0: i32, %arg1: i32) -> (i32, i32, i32) {
    %c0_i32 = arith.constant 0 : i32
    %c0_i32_0 = arith.constant 0 : i32
    return %arg0, %arg1, %c0_i32 : i32, i32, i32
  }
  func.func @transform_9(%arg0: i32, %arg1: i32) -> (i32, i32, i32) {
    %c0_i32 = arith.constant 0 : i32
    %c0_i32_0 = arith.constant 0 : i32
    return %arg0, %arg1, %c0_i32 : i32, i32, i32
  }
}

</mosaic_0001>

<llo_original>
// kernel: tpu_custom_call.1
$region0: #{tpu_custom_call.1}
  #allocation0 [shape = 'u32[]', space=smem, size = 0x4, offset = 0x4, fixed_abs, tag = 'smem constant byte address 0x4 - core index']
  #allocation1 [shape = 'u32[144,128]{1,0:T(1,128)}', space=vmem, size = 0x12000, scoped, tag = 'internal scratch']
  %s0 = inlined_call_operand.vmem [shape: f32[2,8,32], index: 0, kind: input, shape index: {}]
  %s1 = inlined_call_operand.vmem [shape: f32[2,8,32], index: 1, kind: input, shape index: {}]
  %s2 = inlined_call_operand.vmem [shape: f32[32,16], index: 2, kind: input, shape index: {}]
  %s3 = inlined_call_operand.vmem [shape: f32[1,16], index: 3, kind: input, shape index: {}]
  %s4 = inlined_call_operand.vmem [shape: f32[32,16], index: 4, kind: input, shape index: {}]
  %s5 = inlined_call_operand.vmem [shape: f32[1,16], index: 5, kind: input, shape index: {}]
  %s6 = inlined_call_operand.vmem [shape: f32[32,16], index: 6, kind: input, shape index: {}]
  %s7 = inlined_call_operand.vmem [shape: f32[1,16], index: 7, kind: input, shape index: {}]
  %s8 = inlined_call_operand.hbm [shape: f32[2,8,16], index: 8, kind: output, shape index: {0}]
  %s9 = inlined_call_operand.hbm [shape: f32[2,8,8], index: 9, kind: output, shape index: {1}]
  %10 = xla_tuple %s8, %s9
  %s11 = sld [smem:[#allocation0]]
  $region73: #{tpu_custom_call.1} parent=0
    _
  %s13 = ssub.s32 1, %s11
  %s14 = scalar_select 0, %s13, %s11
  $region1: #{tpu_custom_call.1} parent=0
    #allocation2 [shape = 'u8[8192]{0}', space=vmem, size = 0x2000, scoped, tag = 'output window, operand 0']
    #allocation3 [shape = 's32[2]{0}', space=sflag, size = 0x8, scoped, tag = 'scoped memory for tpu_custom_call.1']
    #allocation4 [shape = 'u8[8192]{0}', space=vmem, size = 0x2000, scoped, tag = 'output window, operand 1']
    #allocation5 [shape = 's32[2]{0}', space=sflag, size = 0x8, scoped, tag = 'scoped memory for tpu_custom_call.1']
    %15 = vsyncpa [#allocation3], 0
    %s16 = scalar_lea.sflag [#allocation3], 1
    %17 = vsyncpa %s16, 0
    %18 = vsyncpa [#allocation5], 0
    %s19 = scalar_lea.sflag [#allocation5], 1
    %20 = vsyncpa %s19, 0
    loop: start=0, step=1, limit=4
    $region2: #{tpu_custom_call.1} parent=1 // loop_pre_header
      _
    $region3: #{tpu_custom_call.1} parent=1 // loop_header
      %s22 = sphi 0, %s26
      %p23 = scmp.ge.s32.totalorder %s22, 4
      %s29 = sphi 0, %s41
      %s30 = sphi 0, %s37
      %s31 = sphi 0, %s29
      %s32 = sphi 0, %s30
      %s33 = sphi 0, %s31
      %s34 = sphi 0, %s32
      %s46 = sphi 0, %s48
      %s49 = sphi 0, %s46
      %s50 = sphi 0, %s49
      %s66 = sphi 0, %s50
      %s72 = sphi 0, %s74
      %s75 = sphi 0, %s72
      %s76 = sphi 0, %s75
      %s92 = sphi 0, %s76
      %s96 = sphi 0, %s96
      %s98 = sphi 0, %s96
      %s99 = sphi 0, %s98
      %s113 = sphi 0, %s99
      %s117 = sphi 0, %s117
      %s119 = sphi 0, %s117
      %s120 = sphi 0, %s119
      %s134 = sphi 0, %s120
      %s138 = sphi 0, %s138
      %s140 = sphi 0, %s138
      %s141 = sphi 0, %s140
      %s155 = sphi 0, %s141
      %s159 = sphi 0, %s159
      %s161 = sphi 0, %s159
      %s162 = sphi 0, %s161
      %s176 = sphi 0, %s162
      %s180 = sphi 0, %s180
      %s182 = sphi 0, %s180
      %s183 = sphi 0, %s182
      %s197 = sphi 0, %s183
      %s201 = sphi 0, %s201
      %s203 = sphi 0, %s201
      %s204 = sphi 0, %s203
      %s218 = sphi 0, %s204
      %s226 = sphi 0, %s228
      %s229 = sphi 0, %s226
      %s230 = sphi 0, %s229
      %s246 = sphi 0, %s230
      %s254 = sphi 0, %s256
      %s257 = sphi 0, %s254
      %s258 = sphi 0, %s257
      %s274 = sphi 0, %s258
    $region4: #{tpu_custom_call.1} parent=1 // loop_header_branch
      %25 = sbr.rel (%p23) target = $region8
    $region5: #{tpu_custom_call.1} parent=1 // loop_body
      %s27 = ssub.s32 %s22, 1
      %s28 = ssub.s32 %s22, 2
      %s35 = sadd.s32 1, %s30
      %p36 = scmp.ge.s32.totalorder %s35, 1
      %s37 = scalar_select %p36, 0, %s35
      %s38 = sadd.s32 1, %s29
      %s39 = scalar_select %p36, %s38, %s29
      %p40 = scmp.ge.s32.totalorder %s39, 2
      %s41 = scalar_select %p40, 0, %s39
      %s42 = ssub.s32 %s29, %s41
      %s43 = ssub.s32 %s30, %s37
      %s44 = sor.u32 %s42, %s43
      %p45 = scmp.eq.s32.totalorder %s44, 0
      %s47 = sadd.s32 %s46, 1
      %s48 = scalar_select %p45, %s46, %s47
      %p51 = pneg %p45
      %p52 = scmp.eq.s32.totalorder %s22, 1
      %p53 = por %p51, %p52
      %p54 = scmp.ne.s32.totalorder %s46, %s49
      %p55 = scmp.eq.s32.totalorder %s22, 0
      %p56 = por %p54, %p55
      %p57 = scmp.ne.s32.totalorder %s46, %s49
      %p58 = scmp.eq.s32.totalorder %s27, 1
      %p59 = por %p57, %p58
      %p60 = scmp.ne.s32.totalorder %s49, %s50
      %p61 = scmp.eq.s32.totalorder %s27, 0
      %p62 = por %p60, %p61
      %p63 = scmp.ne.s32.totalorder %s49, %s50
      %p64 = scmp.eq.s32.totalorder %s28, 1
      %p65 = por %p63, %p64
      %p67 = scmp.ne.s32.totalorder %s50, %s66
      %p68 = scmp.eq.s32.totalorder %s28, 0
      %p69 = por %p67, %p68
      %s70 = ssub.s32 %s29, %s41
      %p71 = scmp.eq.s32.totalorder %s70, 0
      %s73 = sadd.s32 %s72, 1
      %s74 = scalar_select %p71, %s72, %s73
      %p77 = pneg %p71
      %p78 = scmp.eq.s32.totalorder %s22, 1
      %p79 = por %p77, %p78
      %p80 = scmp.ne.s32.totalorder %s72, %s75
      %p81 = scmp.eq.s32.totalorder %s22, 0
      %p82 = por %p80, %p81
      %p83 = scmp.ne.s32.totalorder %s72, %s75
      %p84 = scmp.eq.s32.totalorder %s27, 1
      %p85 = por %p83, %p84
      %p86 = scmp.ne.s32.totalorder %s75, %s76
      %p87 = scmp.eq.s32.totalorder %s27, 0
      %p88 = por %p86, %p87
      %p89 = scmp.ne.s32.totalorder %s75, %s76
      %p90 = scmp.eq.s32.totalorder %s28, 1
      %p91 = por %p89, %p90
      %p93 = scmp.ne.s32.totalorder %s76, %s92
      %p94 = scmp.eq.s32.totalorder %s28, 0
      %p95 = por %p93, %p94
      %s97 = sadd.s32 %s96, 1
      %p100 = scmp.eq.s32.totalorder %s22, 1
      %p101 = scmp.ne.s32.totalorder %s96, %s98
      %p102 = scmp.eq.s32.totalorder %s22, 0
      %p103 = por %p101, %p102
      %p104 = scmp.ne.s32.totalorder %s96, %s98
      %p105 = scmp.eq.s32.totalorder %s27, 1
      %p106 = por %p104, %p105
      %p107 = scmp.ne.s32.totalorder %s98, %s99
      %p108 = scmp.eq.s32.totalorder %s27, 0
      %p109 = por %p107, %p108
      %p110 = scmp.ne.s32.totalorder %s98, %s99
      %p111 = scmp.eq.s32.totalorder %s28, 1
      %p112 = por %p110, %p111
      %p114 = scmp.ne.s32.totalorder %s99, %s113
      %p115 = scmp.eq.s32.totalorder %s28, 0
      %p116 = por %p114, %p115
      %s118 = sadd.s32 %s117, 1
      %p121 = scmp.eq.s32.totalorder %s22, 1
      %p122 = scmp.ne.s32.totalorder %s117, %s119
      %p123 = scmp.eq.s32.totalorder %s22, 0
      %p124 = por %p122, %p123
      %p125 = scmp.ne.s32.totalorder %s117, %s119
      %p126 = scmp.eq.s32.totalorder %s27, 1
      %p127 = por %p125, %p126
      %p128 = scmp.ne.s32.totalorder %s119, %s120
      %p129 = scmp.eq.s32.totalorder %s27, 0
      %p130 = por %p128, %p129
      %p131 = scmp.ne.s32.totalorder %s119, %s120
      %p132 = scmp.eq.s32.totalorder %s28, 1
      %p133 = por %p131, %p132
      %p135 = scmp.ne.s32.totalorder %s120, %s134
      %p136 = scmp.eq.s32.totalorder %s28, 0
      %p137 = por %p135, %p136
      %s139 = sadd.s32 %s138, 1
      %p142 = scmp.eq.s32.totalorder %s22, 1
      %p143 = scmp.ne.s32.totalorder %s138, %s140
      %p144 = scmp.eq.s32.totalorder %s22, 0
      %p145 = por %p143, %p144
      %p146 = scmp.ne.s32.totalorder %s138, %s140
      %p147 = scmp.eq.s32.totalorder %s27, 1
      %p148 = por %p146, %p147
      %p149 = scmp.ne.s32.totalorder %s140, %s141
      %p150 = scmp.eq.s32.totalorder %s27, 0
      %p151 = por %p149, %p150
      %p152 = scmp.ne.s32.totalorder %s140, %s141
      %p153 = scmp.eq.s32.totalorder %s28, 1
      %p154 = por %p152, %p153
      %p156 = scmp.ne.s32.totalorder %s141, %s155
      %p157 = scmp.eq.s32.totalorder %s28, 0
      %p158 = por %p156, %p157
      %s160 = sadd.s32 %s159, 1
      %p163 = scmp.eq.s32.totalorder %s22, 1
      %p164 = scmp.ne.s32.totalorder %s159, %s161
      %p165 = scmp.eq.s32.totalorder %s22, 0
      %p166 = por %p164, %p165
      %p167 = scmp.ne.s32.totalorder %s159, %s161
      %p168 = scmp.eq.s32.totalorder %s27, 1
      %p169 = por %p167, %p168
      %p170 = scmp.ne.s32.totalorder %s161, %s162
      %p171 = scmp.eq.s32.totalorder %s27, 0
      %p172 = por %p170, %p171
      %p173 = scmp.ne.s32.totalorder %s161, %s162
      %p174 = scmp.eq.s32.totalorder %s28, 1
      %p175 = por %p173, %p174
      %p177 = scmp.ne.s32.totalorder %s162, %s176
      %p178 = scmp.eq.s32.totalorder %s28, 0
      %p179 = por %p177, %p178
      %s181 = sadd.s32 %s180, 1
      %p184 = scmp.eq.s32.totalorder %s22, 1
      %p185 = scmp.ne.s32.totalorder %s180, %s182
      %p186 = scmp.eq.s32.totalorder %s22, 0
      %p187 = por %p185, %p186
      %p188 = scmp.ne.s32.totalorder %s180, %s182
      %p189 = scmp.eq.s32.totalorder %s27, 1
      %p190 = por %p188, %p189
      %p191 = scmp.ne.s32.totalorder %s182, %s183
      %p192 = scmp.eq.s32.totalorder %s27, 0
      %p193 = por %p191, %p192
      %p194 = scmp.ne.s32.totalorder %s182, %s183
      %p195 = scmp.eq.s32.totalorder %s28, 1
      %p196 = por %p194, %p195
      %p198 = scmp.ne.s32.totalorder %s183, %s197
      %p199 = scmp.eq.s32.totalorder %s28, 0
      %p200 = por %p198, %p199
      %s202 = sadd.s32 %s201, 1
      %p205 = scmp.eq.s32.totalorder %s22, 1
      %p206 = scmp.ne.s32.totalorder %s201, %s203
      %p207 = scmp.eq.s32.totalorder %s22, 0
      %p208 = por %p206, %p207
      %p209 = scmp.ne.s32.totalorder %s201, %s203
      %p210 = scmp.eq.s32.totalorder %s27, 1
      %p211 = por %p209, %p210
      %p212 = scmp.ne.s32.totalorder %s203, %s204
      %p213 = scmp.eq.s32.totalorder %s27, 0
      %p214 = por %p212, %p213
      %p215 = scmp.ne.s32.totalorder %s203, %s204
      %p216 = scmp.eq.s32.totalorder %s28, 1
      %p217 = por %p215, %p216
      %p219 = scmp.ne.s32.totalorder %s204, %s218
      %p220 = scmp.eq.s32.totalorder %s28, 0
      %p221 = por %p219, %p220
      %s222 = ssub.s32 %s29, %s41
      %s223 = ssub.s32 %s30, %s37
      %s224 = sor.u32 %s222, %s223
      %p225 = scmp.eq.s32.totalorder %s224, 0
      %s227 = sadd.s32 %s226, 1
      %s228 = scalar_select %p225, %s226, %s227
      %p231 = pneg %p225
      %p232 = scmp.eq.s32.totalorder %s22, 1
      %p233 = por %p231, %p232
      %p234 = scmp.ne.s32.totalorder %s226, %s229
      %p235 = scmp.eq.s32.totalorder %s22, 0
      %p236 = por %p234, %p235
      %p237 = scmp.ne.s32.totalorder %s226, %s229
      %p238 = scmp.eq.s32.totalorder %s27, 1
      %p239 = por %p237, %p238
      %p240 = scmp.ne.s32.totalorder %s229, %s230
      %p241 = scmp.eq.s32.totalorder %s27, 0
      %p242 = por %p240, %p241
      %p243 = scmp.ne.s32.totalorder %s229, %s230
      %p244 = scmp.eq.s32.totalorder %s28, 1
      %p245 = por %p243, %p244
      %p247 = scmp.ne.s32.totalorder %s230, %s246
      %p248 = scmp.eq.s32.totalorder %s28, 0
      %p249 = por %p247, %p248
      %s250 = ssub.s32 %s29, %s41
      %s251 = ssub.s32 %s30, %s37
      %s252 = sor.u32 %s250, %s251
      %p253 = scmp.eq.s32.totalorder %s252, 0
      %s255 = sadd.s32 %s254, 1
      %s256 = scalar_select %p253, %s254, %s255
      %p259 = pneg %p253
      %p260 = scmp.eq.s32.totalorder %s22, 1
      %p261 = por %p259, %p260
      %p262 = scmp.ne.s32.totalorder %s254, %s257
      %p263 = scmp.eq.s32.totalorder %s22, 0
      %p264 = por %p262, %p263
      %p265 = scmp.ne.s32.totalorder %s254, %s257
      %p266 = scmp.eq.s32.totalorder %s27, 1
      %p267 = por %p265, %p266
      %p268 = scmp.ne.s32.totalorder %s257, %s258
      %p269 = scmp.eq.s32.totalorder %s27, 0
      %p270 = por %p268, %p269
      %p271 = scmp.ne.s32.totalorder %s257, %s258
      %p272 = scmp.eq.s32.totalorder %s28, 1
      %p273 = por %p271, %p272
      %p275 = scmp.ne.s32.totalorder %s258, %s274
      %p276 = scmp.eq.s32.totalorder %s28, 0
      %p277 = por %p275, %p276
      %p278 = scmp.le.s32.totalorder 1, %s22
      %p279 = scmp.lt.s32.totalorder %s22, 3
      %p280 = pnand %p278, %p279
      %p281 = pneg %p280
      // Predicated region
      $region9: #{tpu_custom_call.1} parent=5 // pred_check
        _
      $region10: #{tpu_custom_call.1} parent=5 // pred_check_branch
        %283 = sbr.rel (%p280) target = $region12
      $region11: #{tpu_custom_call.1} parent=5 // pred_region
        %s284 = ssub.s32 %s22, 1
        // Predicated region
        $region13: #{tpu_custom_call.1} parent=11 // pred_check
          %p285 = pneg %p109
        $region14: #{tpu_custom_call.1} parent=11 // pred_check_branch
          %287 = sbr.rel (%p285) target = $region16
        $region15: #{tpu_custom_call.1} parent=11 // pred_region
          _
        $region16: #{tpu_custom_call.1} parent=11 // pred_fallthru
          _
        // Predicated region
        $region17: #{tpu_custom_call.1} parent=11 // pred_check
          %p288 = pneg %p130
        $region18: #{tpu_custom_call.1} parent=11 // pred_check_branch
          %290 = sbr.rel (%p288) target = $region20
        $region19: #{tpu_custom_call.1} parent=11 // pred_region
          _
        $region20: #{tpu_custom_call.1} parent=11 // pred_fallthru
          _
        // Predicated region
        $region21: #{tpu_custom_call.1} parent=11 // pred_check
          %p291 = pneg %p151
        $region22: #{tpu_custom_call.1} parent=11 // pred_check_branch
          %293 = sbr.rel (%p291) target = $region24
        $region23: #{tpu_custom_call.1} parent=11 // pred_region
          _
        $region24: #{tpu_custom_call.1} parent=11 // pred_fallthru
          _
        // Predicated region
        $region25: #{tpu_custom_call.1} parent=11 // pred_check
          %p294 = pneg %p172
        $region26: #{tpu_custom_call.1} parent=11 // pred_check_branch
          %296 = sbr.rel (%p294) target = $region28
        $region27: #{tpu_custom_call.1} parent=11 // pred_region
          _
        $region28: #{tpu_custom_call.1} parent=11 // pred_fallthru
          _
        // Predicated region
        $region29: #{tpu_custom_call.1} parent=11 // pred_check
          %p297 = pneg %p193
        $region30: #{tpu_custom_call.1} parent=11 // pred_check_branch
          %299 = sbr.rel (%p297) target = $region32
        $region31: #{tpu_custom_call.1} parent=11 // pred_region
          _
        $region32: #{tpu_custom_call.1} parent=11 // pred_fallthru
          _
        // Predicated region
        $region33: #{tpu_custom_call.1} parent=11 // pred_check
          %p300 = pneg %p214
        $region34: #{tpu_custom_call.1} parent=11 // pred_check_branch
          %302 = sbr.rel (%p300) target = $region36
        $region35: #{tpu_custom_call.1} parent=11 // pred_region
          _
        $region36: #{tpu_custom_call.1} parent=11 // pred_fallthru
          _
      $region12: #{tpu_custom_call.1} parent=5 // pred_fallthru
        _
      %p303 = scmp.lt.s32.totalorder %s22, 2
      // Predicated region
      $region37: #{tpu_custom_call.1} parent=5 // pred_check
        %p304 = pneg %p303
      $region38: #{tpu_custom_call.1} parent=5 // pred_check_branch
        %306 = sbr.rel (%p304) target = $region40
      $region39: #{tpu_custom_call.1} parent=5 // pred_region
        // Predicated region
        $region41: #{tpu_custom_call.1} parent=39 // pred_check
          %p307 = pneg %p56
        $region42: #{tpu_custom_call.1} parent=39 // pred_check_branch
          %309 = sbr.rel (%p307) target = $region44
        $region43: #{tpu_custom_call.1} parent=39 // pred_region
          %p310 = scmp.lt.s32.totalorder %s29, 1
          %s311 = scalar_select %p310, %s29, 1
          %p312 = scmp.lt.s32.totalorder %s30, 0
          %s313 = scalar_select %p312, %s30, 0
          %s314 = sadd.s32 %s313, %s311
          %s315 = smul.addr %s314, 8
          %s316 = scalar_lea.vmem %s0, %s315
        $region44: #{tpu_custom_call.1} parent=39 // pred_fallthru
          _
        // Predicated region
        $region45: #{tpu_custom_call.1} parent=39 // pred_check
          %p317 = pneg %p82
        $region46: #{tpu_custom_call.1} parent=39 // pred_check_branch
          %319 = sbr.rel (%p317) target = $region48
        $region47: #{tpu_custom_call.1} parent=39 // pred_region
          %p320 = scmp.lt.s32.totalorder %s29, 1
          %s321 = scalar_select %p320, %s29, 1
          %s322 = smul.addr %s321, 8
          %s323 = scalar_lea.vmem %s1, %s322
        $region48: #{tpu_custom_call.1} parent=39 // pred_fallthru
          _
      $region40: #{tpu_custom_call.1} parent=5 // pred_fallthru
        _
      %p324 = scmp.le.s32.totalorder 1, %s22
      %p325 = scmp.lt.s32.totalorder %s22, 3
      %p326 = pnand %p324, %p325
      %p327 = pneg %p326
      // Predicated region
      $region49: #{tpu_custom_call.1} parent=5 // pred_check
        _
      $region50: #{tpu_custom_call.1} parent=5 // pred_check_branch
        %329 = sbr.rel (%p326) target = $region52
      $region51: #{tpu_custom_call.1} parent=5 // pred_region
        %s330 = ssub.s32 %s22, 1
        %p331 = scmp.lt.s32.totalorder %s31, 1
        %s332 = scalar_select %p331, %s31, 1
        %p333 = scmp.lt.s32.totalorder %s32, 0
        %s334 = scalar_select %p333, %s32, 0
        %s335 = sadd.s32 %s334, %s332
        %s336 = smul.addr %s335, 8
        %s337 = scalar_lea.vmem %s0, %s336
        %p338 = pneg %p62
        %p339 = pneg %p59
        %p340 = scmp.lt.s32.totalorder %s31, 1
        %s341 = scalar_select %p340, %s31, 1
        %s342 = smul.addr %s341, 8
        %s343 = scalar_lea.vmem %s1, %s342
        %p344 = pneg %p88
        %p345 = pneg %p85
        %p346 = pneg %p109
        %p347 = pneg %p106
        %p348 = pneg %p130
        %p349 = pneg %p127
        %p350 = pneg %p151
        %p351 = pneg %p148
        %p352 = pneg %p172
        %p353 = pneg %p169
        %p354 = pneg %p193
        %p355 = pneg %p190
        %p356 = pneg %p214
        %p357 = pneg %p211
        %p358 = pneg %p242
        %p359 = pneg %p239
        %s360 = sand.u32 %s229, 1
        %s361 = scalar_lea.sflag [#allocation3], %s360
        %s362 = sand.u32 %s229, 1
        %s363 = smul.addr %s362, 8
        %s364 = scalar_lea.vmem [#allocation2], %s363
        %p365 = pneg %p270
        %p366 = pneg %p267
        %s367 = sand.u32 %s257, 1
        %s368 = scalar_lea.sflag [#allocation5], %s367
        %s369 = sand.u32 %s257, 1
        %s370 = smul.addr %s369, 8
        %s371 = scalar_lea.vmem [#allocation4], %s370
        %p372 = scmp.lt.s32.totalorder %s31, 1
        %s373 = scalar_select %p372, %s31, 1
        %p374 = scmp.lt.s32.totalorder %s32, 0
        %s375 = scalar_select %p374, %s32, 0
        %s376 = sadd.s32 %s375, %s373
        %s377 = smul.addr %s376, 8
        %s378 = scalar_lea.vmem %s0, %s377
        %p379 = scmp.lt.s32.totalorder %s31, 1
        %s380 = scalar_select %p379, %s31, 1
        %s381 = smul.addr %s380, 8
        %s382 = scalar_lea.vmem %s1, %s381
        %v383 = vld [vmem:[%s382] sm:$0xff]
        %v384 = vld [vmem:[%s4] sm:$0xff]
        %v385 = vld [vmem:[%s4 + $0x8] sm:$0xff]
        %v386 = vld [vmem:[%s4 + $0x10] sm:$0xff]
        %v387 = vld [vmem:[%s4 + $0x18] sm:$0xff]
        %v388 = vld [vmem:[%s5] sm:$0x1]
        %v390 = vlaneseq
        %v391 = vshrl.u32 %v390, 7
        %v392 = vsub.s32 0, %v391
        %v393 = vrot.slane %v388, %v392
        %vm395 = vcmask 261120
        %v397 = vsel %vm395, %v383, 0
        %399 = vmatprep.subr.mxu0 0.0
        %400 = vmatpush1.msra.mxu0 %v384
        %401 = vmatprep.subr.mxu0 0.0
        %402 = vmatpush1.msra.mxu0 %v385
        %403 = vmatprep.subr.mxu0 0.0
        %404 = vmatpush1.msra.mxu0 %v386
        %405 = vmatprep.subr.mxu0 0.0
        %406 = vmatpush1.msra.mxu0 %v387
        %407 = vmatprep.subr.mxu0 0.0
        %408 = vmatpush1.msra.mxu0 0.0
        %409 = vmatprep.subr.mxu0 0.0
        %410 = vmatpush1.msra.mxu0 0.0
        %411 = vmatprep.subr.mxu0 0.0
        %412 = vmatpush1.msra.mxu0 0.0
        %413 = vmatprep.subr.mxu0 0.0
        %414 = vmatpush1.msra.mxu0 0.0
        %415 = vmatprep.subr.mxu0 0.0
        %416 = vmatpush1.msra.mxu0 0.0
        %417 = vmatprep.subr.mxu0 0.0
        %418 = vmatpush1.msra.mxu0 0.0
        %419 = vmatprep.subr.mxu0 0.0
        %420 = vmatpush1.msra.mxu0 0.0
        %421 = vmatprep.subr.mxu0 0.0
        %422 = vmatpush1.msra.mxu0 0.0
        %423 = vmatprep.subr.mxu0 0.0
        %424 = vmatpush1.msra.mxu0 0.0
        %425 = vmatprep.subr.mxu0 0.0
        %426 = vmatpush1.msra.mxu0 0.0
        %427 = vmatprep.subr.mxu0 0.0
        %428 = vmatpush1.msra.mxu0 0.0
        %429 = vmatprep.subr.mxu0 0.0
        %430 = vmatpush1.msra.mxu0 0.0
        %431 = vmatprep.subr.mxu0 0.0
        %432 = vmatpush1.msra.mxu0 0.0
        %433 = vmatprep.subr.mxu0 0.0
        %434 = vmatpush1.msra.mxu0 0.0
        %435 = vmatprep.subr.mxu0 0.0
        %436 = vmatpush1.msra.mxu0 0.0
        %437 = vmatprep.subr.mxu0 0.0
        %438 = vmatpush1.msra.mxu0 0.0
        %439 = vmatprep.subr.mxu0 0.0
        %440 = vmatpush1.msra.mxu0 0.0
        %441 = vmatprep.subr.mxu0 0.0
        %442 = vmatpush1.msra.mxu0 0.0
        %443 = vmatprep.subr.mxu0 0.0
        %444 = vmatpush1.msra.mxu0 0.0
        %445 = vmatprep.subr.mxu0 0.0
        %446 = vmatpush1.msra.mxu0 0.0
        %447 = vmatprep.subr.mxu0 0.0
        %448 = vmatpush1.msra.mxu0 0.0
        %449 = vmatprep.subr.mxu0 0.0
        %450 = vmatpush1.msra.mxu0 0.0
        %451 = vmatprep.subr.mxu0 0.0
        %452 = vmatpush1.msra.mxu0 0.0
        %453 = vmatprep.subr.mxu0 0.0
        %454 = vmatpush1.msra.mxu0 0.0
        %455 = vmatprep.subr.mxu0 0.0
        %456 = vmatpush1.msra.mxu0 0.0
        %457 = vmatprep.subr.mxu0 0.0
        %458 = vmatpush1.msra.mxu0 0.0
        %459 = vmatprep.subr.mxu0 0.0
        %460 = vmatpush1.msra.mxu0 0.0
        %461 = vmatprep.subr.mxu0 0.0
        %462 = vmatpush1.msra.mxu0 0.0
        %463 = vmatprep.mubr.f32.mxu0 0.0
        %464 = vmatmul.mubr.f32.gmra.mrb[0].mxu0 %v397
        %v465 = vpop.f32.mrb[0].mxu0
        %v466 = vadd.f32 %v393, %v465
        %v467 = vpop.f32.mrb[0].mxu0
        %468 = vdwg.mxu0
        %v469 = vld [vmem:[%s6] sm:$0xff]
        %v470 = vld [vmem:[%s6 + $0x8] sm:$0xff]
        %v471 = vld [vmem:[%s6 + $0x10] sm:$0xff]
        %v472 = vld [vmem:[%s6 + $0x18] sm:$0xff]
        %v473 = vld [vmem:[%s7] sm:$0x1]
        %v475 = vlaneseq
        %v476 = vshrl.u32 %v475, 7
        %v477 = vsub.s32 0, %v476
        %v478 = vrot.slane %v473, %v477
        %480 = vmatprep.subr.mxu0 0.0
        %481 = vmatpush1.msra.mxu0 %v469
        %482 = vmatprep.subr.mxu0 0.0
        %483 = vmatpush1.msra.mxu0 %v470
        %484 = vmatprep.subr.mxu0 0.0
        %485 = vmatpush1.msra.mxu0 %v471
        %486 = vmatprep.subr.mxu0 0.0
        %487 = vmatpush1.msra.mxu0 %v472
        %488 = vmatprep.subr.mxu0 0.0
        %489 = vmatpush1.msra.mxu0 0.0
        %490 = vmatprep.subr.mxu0 0.0
        %491 = vmatpush1.msra.mxu0 0.0
        %492 = vmatprep.subr.mxu0 0.0
        %493 = vmatpush1.msra.mxu0 0.0
        %494 = vmatprep.subr.mxu0 0.0
        %495 = vmatpush1.msra.mxu0 0.0
        %496 = vmatprep.subr.mxu0 0.0
        %497 = vmatpush1.msra.mxu0 0.0
        %498 = vmatprep.subr.mxu0 0.0
        %499 = vmatpush1.msra.mxu0 0.0
        %500 = vmatprep.subr.mxu0 0.0
        %501 = vmatpush1.msra.mxu0 0.0
        %502 = vmatprep.subr.mxu0 0.0
        %503 = vmatpush1.msra.mxu0 0.0
        %504 = vmatprep.subr.mxu0 0.0
        %505 = vmatpush1.msra.mxu0 0.0
        %506 = vmatprep.subr.mxu0 0.0
        %507 = vmatpush1.msra.mxu0 0.0
        %508 = vmatprep.subr.mxu0 0.0
        %509 = vmatpush1.msra.mxu0 0.0
        %510 = vmatprep.subr.mxu0 0.0
        %511 = vmatpush1.msra.mxu0 0.0
        %512 = vmatprep.subr.mxu0 0.0
        %513 = vmatpush1.msra.mxu0 0.0
        %514 = vmatprep.subr.mxu0 0.0
        %515 = vmatpush1.msra.mxu0 0.0
        %516 = vmatprep.subr.mxu0 0.0
        %517 = vmatpush1.msra.mxu0 0.0
        %518 = vmatprep.subr.mxu0 0.0
        %519 = vmatpush1.msra.mxu0 0.0
        %520 = vmatprep.subr.mxu0 0.0
        %521 = vmatpush1.msra.mxu0 0.0
        %522 = vmatprep.subr.mxu0 0.0
        %523 = vmatpush1.msra.mxu0 0.0
        %524 = vmatprep.subr.mxu0 0.0
        %525 = vmatpush1.msra.mxu0 0.0
        %526 = vmatprep.subr.mxu0 0.0
        %527 = vmatpush1.msra.mxu0 0.0
        %528 = vmatprep.subr.mxu0 0.0
        %529 = vmatpush1.msra.mxu0 0.0
        %530 = vmatprep.subr.mxu0 0.0
        %531 = vmatpush1.msra.mxu0 0.0
        %532 = vmatprep.subr.mxu0 0.0
        %533 = vmatpush1.msra.mxu0 0.0
        %534 = vmatprep.subr.mxu0 0.0
        %535 = vmatpush1.msra.mxu0 0.0
        %536 = vmatprep.subr.mxu0 0.0
        %537 = vmatpush1.msra.mxu0 0.0
        %538 = vmatprep.subr.mxu0 0.0
        %539 = vmatpush1.msra.mxu0 0.0
        %540 = vmatprep.subr.mxu0 0.0
        %541 = vmatpush1.msra.mxu0 0.0
        %542 = vmatprep.subr.mxu0 0.0
        %543 = vmatpush1.msra.mxu0 0.0
        %544 = vmatprep.mubr.f32.mxu0 0.0
        %545 = vmatmul.mubr.f32.gmra.mrb[0].mxu0 %v397
        %v546 = vpop.f32.mrb[0].mxu0
        %v547 = vadd.f32 %v478, %v546
        %v548 = vpop.f32.mrb[0].mxu0
        %549 = vdwg.mxu0
        %v550 = vld [vmem:[%s378] sm:$0xff]
        %v551 = vld [vmem:[%s2] sm:$0xff]
        %v552 = vld [vmem:[%s2 + $0x8] sm:$0xff]
        %v553 = vld [vmem:[%s2 + $0x10] sm:$0xff]
        %v554 = vld [vmem:[%s2 + $0x18] sm:$0xff]
        %v555 = vld [vmem:[%s3] sm:$0x1]
        %v557 = vlaneseq
        %v558 = vshrl.u32 %v557, 7
        %v559 = vsub.s32 0, %v558
        %v560 = vrot.slane %v555, %v559
        %v563 = vsel %vm395, %v550, 0
        %565 = vmatprep.subr.mxu0 0.0
        %566 = vmatpush1.msra.mxu0 %v551
        %567 = vmatprep.subr.mxu0 0.0
        %568 = vmatpush1.msra.mxu0 %v552
        %569 = vmatprep.subr.mxu0 0.0
        %570 = vmatpush1.msra.mxu0 %v553
        %571 = vmatprep.subr.mxu0 0.0
        %572 = vmatpush1.msra.mxu0 %v554
        %573 = vmatprep.subr.mxu0 0.0
        %574 = vmatpush1.msra.mxu0 0.0
        %575 = vmatprep.subr.mxu0 0.0
        %576 = vmatpush1.msra.mxu0 0.0
        %577 = vmatprep.subr.mxu0 0.0
        %578 = vmatpush1.msra.mxu0 0.0
        %579 = vmatprep.subr.mxu0 0.0
        %580 = vmatpush1.msra.mxu0 0.0
        %581 = vmatprep.subr.mxu0 0.0
        %582 = vmatpush1.msra.mxu0 0.0
        %583 = vmatprep.subr.mxu0 0.0
        %584 = vmatpush1.msra.mxu0 0.0
        %585 = vmatprep.subr.mxu0 0.0
        %586 = vmatpush1.msra.mxu0 0.0
        %587 = vmatprep.subr.mxu0 0.0
        %588 = vmatpush1.msra.mxu0 0.0
        %589 = vmatprep.subr.mxu0 0.0
        %590 = vmatpush1.msra.mxu0 0.0
        %591 = vmatprep.subr.mxu0 0.0
        %592 = vmatpush1.msra.mxu0 0.0
        %593 = vmatprep.subr.mxu0 0.0
        %594 = vmatpush1.msra.mxu0 0.0
        %595 = vmatprep.subr.mxu0 0.0
        %596 = vmatpush1.msra.mxu0 0.0
        %597 = vmatprep.subr.mxu0 0.0
        %598 = vmatpush1.msra.mxu0 0.0
        %599 = vmatprep.subr.mxu0 0.0
        %600 = vmatpush1.msra.mxu0 0.0
        %601 = vmatprep.subr.mxu0 0.0
        %602 = vmatpush1.msra.mxu0 0.0
        %603 = vmatprep.subr.mxu0 0.0
        %604 = vmatpush1.msra.mxu0 0.0
        %605 = vmatprep.subr.mxu0 0.0
        %606 = vmatpush1.msra.mxu0 0.0
        %607 = vmatprep.subr.mxu0 0.0
        %608 = vmatpush1.msra.mxu0 0.0
        %609 = vmatprep.subr.mxu0 0.0
        %610 = vmatpush1.msra.mxu0 0.0
        %611 = vmatprep.subr.mxu0 0.0
        %612 = vmatpush1.msra.mxu0 0.0
        %613 = vmatprep.subr.mxu0 0.0
        %614 = vmatpush1.msra.mxu0 0.0
        %615 = vmatprep.subr.mxu0 0.0
        %616 = vmatpush1.msra.mxu0 0.0
        %617 = vmatprep.subr.mxu0 0.0
        %618 = vmatpush1.msra.mxu0 0.0
        %619 = vmatprep.subr.mxu0 0.0
        %620 = vmatpush1.msra.mxu0 0.0
        %621 = vmatprep.subr.mxu0 0.0
        %622 = vmatpush1.msra.mxu0 0.0
        %623 = vmatprep.subr.mxu0 0.0
        %624 = vmatpush1.msra.mxu0 0.0
        %625 = vmatprep.subr.mxu0 0.0
        %626 = vmatpush1.msra.mxu0 0.0
        %627 = vmatprep.subr.mxu0 0.0
        %628 = vmatpush1.msra.mxu0 0.0
        %629 = vmatprep.mubr.f32.mxu0 0.0
        %630 = vmatmul.mubr.f32.gmra.mrb[0].mxu0 %v563
        %v631 = vpop.f32.mrb[0].mxu0
        %v632 = vadd.f32 %v560, %v631
        %v633 = vpop.f32.mrb[0].mxu0
        %634 = vdwg.mxu0
        %v635 = vmul.f32 %v632, 0.25
        %vm636 = vcmask 130048
        %v638 = vsel %vm636, %v635, 0
        %v641 = vsel %vm636, %v466, 0
        %643 = vmatprep.subr.mxu0 0.0
        %644 = vmatpush1.xpose.msra.mxu0 %v641
        %645 = vmatprep.subr.mxu0 0.0
        %646 = vmatpush1.xpose.msra.mxu0 0.0
        %647 = vmatprep.subr.mxu0 0.0
        %648 = vmatpush1.xpose.msra.mxu0 0.0
        %649 = vmatprep.subr.mxu0 0.0
        %650 = vmatpush1.xpose.msra.mxu0 0.0
        %651 = vmatprep.subr.mxu0 0.0
        %652 = vmatpush1.xpose.msra.mxu0 0.0
        %653 = vmatprep.subr.mxu0 0.0
        %654 = vmatpush1.xpose.msra.mxu0 0.0
        %655 = vmatprep.subr.mxu0 0.0
        %656 = vmatpush1.xpose.msra.mxu0 0.0
        %657 = vmatprep.subr.mxu0 0.0
        %658 = vmatpush1.xpose.msra.mxu0 0.0
        %659 = vmatprep.subr.mxu0 0.0
        %660 = vmatpush1.xpose.msra.mxu0 0.0
        %661 = vmatprep.subr.mxu0 0.0
        %662 = vmatpush1.xpose.msra.mxu0 0.0
        %663 = vmatprep.subr.mxu0 0.0
        %664 = vmatpush1.xpose.msra.mxu0 0.0
        %665 = vmatprep.subr.mxu0 0.0
        %666 = vmatpush1.xpose.msra.mxu0 0.0
        %667 = vmatprep.subr.mxu0 0.0
        %668 = vmatpush1.xpose.msra.mxu0 0.0
        %669 = vmatprep.subr.mxu0 0.0
        %670 = vmatpush1.xpose.msra.mxu0 0.0
        %671 = vmatprep.subr.mxu0 0.0
        %672 = vmatpush1.xpose.msra.mxu0 0.0
        %673 = vmatprep.subr.mxu0 0.0
        %674 = vmatpush1.xpose.msra.mxu0 0.0
        %675 = vmatprep.subr.mxu0 0.0
        %676 = vmatpush1.xpose.msra.mxu0 0.0
        %677 = vmatprep.subr.mxu0 0.0
        %678 = vmatpush1.xpose.msra.mxu0 0.0
        %679 = vmatprep.subr.mxu0 0.0
        %680 = vmatpush1.xpose.msra.mxu0 0.0
        %681 = vmatprep.subr.mxu0 0.0
        %682 = vmatpush1.xpose.msra.mxu0 0.0
        %683 = vmatprep.subr.mxu0 0.0
        %684 = vmatpush1.xpose.msra.mxu0 0.0
        %685 = vmatprep.subr.mxu0 0.0
        %686 = vmatpush1.xpose.msra.mxu0 0.0
        %687 = vmatprep.subr.mxu0 0.0
        %688 = vmatpush1.xpose.msra.mxu0 0.0
        %689 = vmatprep.subr.mxu0 0.0
        %690 = vmatpush1.xpose.msra.mxu0 0.0
        %691 = vmatprep.subr.mxu0 0.0
        %692 = vmatpush1.xpose.msra.mxu0 0.0
        %693 = vmatprep.subr.mxu0 0.0
        %694 = vmatpush1.xpose.msra.mxu0 0.0
        %695 = vmatprep.subr.mxu0 0.0
        %696 = vmatpush1.xpose.msra.mxu0 0.0
        %697 = vmatprep.subr.mxu0 0.0
        %698 = vmatpush1.xpose.msra.mxu0 0.0
        %699 = vmatprep.subr.mxu0 0.0
        %700 = vmatpush1.xpose.msra.mxu0 0.0
        %701 = vmatprep.subr.mxu0 0.0
        %702 = vmatpush1.xpose.msra.mxu0 0.0
        %703 = vmatprep.subr.mxu0 0.0
        %704 = vmatpush1.xpose.msra.mxu0 0.0
        %705 = vmatprep.subr.mxu0 0.0
        %706 = vmatpush1.xpose.msra.mxu0 0.0
        %707 = vmatprep.mubr.f32.mxu0 0.0
        %708 = vmatmul.mubr.f32.gmra.mrb[0].mxu0 %v638
        %v709 = vpop.f32.mrb[0].mxu0
        %v710 = vadd.f32 0.0, %v709
        %v711 = vpop.f32.mrb[0].mxu0
        %712 = vdwg.mxu0
        %vm713 = vcmask 64512
        %v714 = vsel %vm713, %v710, -inf
        %715 = vmax.xlane.f32.xlu0 %v714
        %v716 = vpop.xlane.xlu0 %715
        %v717 = vsub.f32 %v710, %v716
        %v718 = vmul.f32 %v717, 1.442695
        %v719 = vpow.pop %v718
        %v720 = vsel %vm713, %v719, 0.0
        %721 = vadd.xlane.f32.xlu0 %v720
        %v722 = vpop.xlane.xlu0 %721
        %v723 = vrcp.pop %v722
        %v724 = vmul.f32 %v719, %v723
        %v726 = vsel %vm713, %v724, 0
        %728 = vmatprep.subr.mxu0 0.0
        %729 = vmatpush1.msra.mxu0 %v547
        %730 = vmatprep.subr.mxu0 0.0
        %731 = vmatpush1.msra.mxu0 0.0
        %732 = vmatprep.subr.mxu0 0.0
        %733 = vmatpush1.msra.mxu0 0.0
        %734 = vmatprep.subr.mxu0 0.0
        %735 = vmatpush1.msra.mxu0 0.0
        %736 = vmatprep.subr.mxu0 0.0
        %737 = vmatpush1.msra.mxu0 0.0
        %738 = vmatprep.subr.mxu0 0.0
        %739 = vmatpush1.msra.mxu0 0.0
        %740 = vmatprep.subr.mxu0 0.0
        %741 = vmatpush1.msra.mxu0 0.0
        %742 = vmatprep.subr.mxu0 0.0
        %743 = vmatpush1.msra.mxu0 0.0
        %744 = vmatprep.subr.mxu0 0.0
        %745 = vmatpush1.msra.mxu0 0.0
        %746 = vmatprep.subr.mxu0 0.0
        %747 = vmatpush1.msra.mxu0 0.0
        %748 = vmatprep.subr.mxu0 0.0
        %749 = vmatpush1.msra.mxu0 0.0
        %750 = vmatprep.subr.mxu0 0.0
        %751 = vmatpush1.msra.mxu0 0.0
        %752 = vmatprep.subr.mxu0 0.0
        %753 = vmatpush1.msra.mxu0 0.0
        %754 = vmatprep.subr.mxu0 0.0
        %755 = vmatpush1.msra.mxu0 0.0
        %756 = vmatprep.subr.mxu0 0.0
        %757 = vmatpush1.msra.mxu0 0.0
        %758 = vmatprep.subr.mxu0 0.0
        %759 = vmatpush1.msra.mxu0 0.0
        %760 = vmatprep.subr.mxu0 0.0
        %761 = vmatpush1.msra.mxu0 0.0
        %762 = vmatprep.subr.mxu0 0.0
        %763 = vmatpush1.msra.mxu0 0.0
        %764 = vmatprep.subr.mxu0 0.0
        %765 = vmatpush1.msra.mxu0 0.0
        %766 = vmatprep.subr.mxu0 0.0
        %767 = vmatpush1.msra.mxu0 0.0
        %768 = vmatprep.subr.mxu0 0.0
        %769 = vmatpush1.msra.mxu0 0.0
        %770 = vmatprep.subr.mxu0 0.0
        %771 = vmatpush1.msra.mxu0 0.0
        %772 = vmatprep.subr.mxu0 0.0
        %773 = vmatpush1.msra.mxu0 0.0
        %774 = vmatprep.subr.mxu0 0.0
        %775 = vmatpush1.msra.mxu0 0.0
        %776 = vmatprep.subr.mxu0 0.0
        %777 = vmatpush1.msra.mxu0 0.0
        %778 = vmatprep.subr.mxu0 0.0
        %779 = vmatpush1.msra.mxu0 0.0
        %780 = vmatprep.subr.mxu0 0.0
        %781 = vmatpush1.msra.mxu0 0.0
        %782 = vmatprep.subr.mxu0 0.0
        %783 = vmatpush1.msra.mxu0 0.0
        %784 = vmatprep.subr.mxu0 0.0
        %785 = vmatpush1.msra.mxu0 0.0
        %786 = vmatprep.subr.mxu0 0.0
        %787 = vmatpush1.msra.mxu0 0.0
        %788 = vmatprep.subr.mxu0 0.0
        %789 = vmatpush1.msra.mxu0 0.0
        %790 = vmatprep.subr.mxu0 0.0
        %791 = vmatpush1.msra.mxu0 0.0
        %792 = vmatprep.mubr.f32.mxu0 0.0
        %793 = vmatmul.mubr.f32.gmra.mrb[0].mxu0 %v726
        %v794 = vpop.f32.mrb[0].mxu0
        %v795 = vadd.f32 0.0, %v794
        %v796 = vpop.f32.mrb[0].mxu0
        %797 = vdwg.mxu0
        %798 = vst.msk [vmem:[%s371] sm:$0xff] %vm713, %v724
        %799 = vst.msk [vmem:[%s364] sm:$0xff] %vm636, %v795
        %s800 = sand.u32 %s229, 1
        %s801 = scalar_lea.sflag [#allocation3], %s800
        %s802 = sand.u32 %s229, 1
        %s803 = smul.addr %s802, 8
        %s804 = scalar_lea.vmem [#allocation2], %s803
        %s805 = sand.u32 %s257, 1
        %s806 = scalar_lea.sflag [#allocation5], %s805
        %s807 = sand.u32 %s257, 1
        %s808 = smul.addr %s807, 8
        %s809 = scalar_lea.vmem [#allocation4], %s808
        // Predicated region
        $region53: #{tpu_custom_call.1} parent=51 // pred_check
          %p810 = pneg %p239
        $region54: #{tpu_custom_call.1} parent=51 // pred_check_branch
          %812 = sbr.rel (%p810) target = $region56
        $region55: #{tpu_custom_call.1} parent=51 // pred_region
          %s814 = ssub.s32 128, 128
          %815 = vsyncadd %s801, %s814
          %s816 = sadd.s32 %s32, %s31
          %s817 = smul.addr %s816, 128
          %s818 = scalar_lea.hbm %s8, %s817
          %s820 = sshll.u32 %s804, 4
          %s821 = int_to_ptr.vmem [resolvable:$true] %s820
          %823 = dma.vmem_to_hbm [thread:$0]  %s821, 128, %s818, %s801
        $region56: #{tpu_custom_call.1} parent=51 // pred_fallthru
          _
        // Predicated region
        $region57: #{tpu_custom_call.1} parent=51 // pred_check
          %p824 = pneg %p267
        $region58: #{tpu_custom_call.1} parent=51 // pred_check_branch
          %826 = sbr.rel (%p824) target = $region60
        $region59: #{tpu_custom_call.1} parent=51 // pred_region
          %s828 = ssub.s32 128, 128
          %829 = vsyncadd %s806, %s828
          %s830 = sadd.s32 %s32, %s31
          %s831 = smul.addr %s830, 128
          %s832 = scalar_lea.hbm %s9, %s831
          %s834 = sshll.u32 %s809, 4
          %s835 = int_to_ptr.vmem [resolvable:$true] %s834
          %837 = dma.vmem_to_hbm [thread:$0]  %s835, 128, %s832, %s806
        $region60: #{tpu_custom_call.1} parent=51 // pred_fallthru
          _
      $region52: #{tpu_custom_call.1} parent=5 // pred_fallthru
        _
      %p838 = scmp.le.s32.totalorder 2, %s22
      // Predicated region
      $region61: #{tpu_custom_call.1} parent=5 // pred_check
        %p839 = pneg %p838
      $region62: #{tpu_custom_call.1} parent=5 // pred_check_branch
        %841 = sbr.rel (%p839) target = $region64
      $region63: #{tpu_custom_call.1} parent=5 // pred_region
        %s842 = ssub.s32 %s22, 2
        // Predicated region
        $region65: #{tpu_custom_call.1} parent=63 // pred_check
          %p843 = pneg %p245
        $region66: #{tpu_custom_call.1} parent=63 // pred_check_branch
          %845 = sbr.rel (%p843) target = $region68
        $region67: #{tpu_custom_call.1} parent=63 // pred_region
          %s846 = sand.u32 %s230, 1
          %s847 = scalar_lea.sflag [#allocation3], %s846
          %s848 = sand.u32 %s230, 1
          %s849 = smul.addr %s848, 8
          %s850 = scalar_lea.vmem [#allocation2], %s849
          %851 = dma.done %s847, 128
        $region68: #{tpu_custom_call.1} parent=63 // pred_fallthru
          _
        // Predicated region
        $region69: #{tpu_custom_call.1} parent=63 // pred_check
          %p852 = pneg %p273
        $region70: #{tpu_custom_call.1} parent=63 // pred_check_branch
          %854 = sbr.rel (%p852) target = $region72
        $region71: #{tpu_custom_call.1} parent=63 // pred_region
          %s855 = sand.u32 %s258, 1
          %s856 = scalar_lea.sflag [#allocation5], %s855
          %s857 = sand.u32 %s258, 1
          %s858 = smul.addr %s857, 8
          %s859 = scalar_lea.vmem [#allocation4], %s858
          %860 = dma.done %s856, 128
        $region72: #{tpu_custom_call.1} parent=63 // pred_fallthru
          _
      $region64: #{tpu_custom_call.1} parent=5 // pred_fallthru
        _
    $region6: #{tpu_custom_call.1} parent=1 // loop_footer
      %s26 = sadd.s32 1, %s22
    $region7: #{tpu_custom_call.1} parent=1 // loop_footer_branch
      %21 = sbr.rel target = $region3
    $region8: #{tpu_custom_call.1} parent=1 // loop_exit
      _
    %861 = vsyncpa [#allocation3], 1
    %s862 = scalar_lea.sflag [#allocation3], 1
    %863 = vsyncpa %s862, 1
    %864 = vsyncpa [#allocation5], 1
    %s865 = scalar_lea.sflag [#allocation5], 1
    %866 = vsyncpa %s865, 1

</llo_original>
